<compile_context>
chip_gen: v5e
topology: v5e:2x2
jax: 0.10.0
libtpu: 0.0.40
codegen_flags: <defaults>
</compile_context>

<pallas_src>
import functools

import jax
import jax.numpy as jnp
from jax.experimental import pallas as pl
from jax.experimental.pallas import tpu as pltpu

_LANE = 128
_SUBLANE = 8


def _round_up(x: int, m: int) -> int:
    return ((x + m - 1) // m) * m


def _linear_sigmoid_kernel(x_ref, w_ref, b_ref, o_ref):
    # x_ref : (tb, n_input)   f32   batch tile of activations
    # w_ref : (n_input, tn)   f32   (K, N) weight tile (pre-transposed, padded)
    # b_ref : (1, tn)         f32   bias tile
    # o_ref : (tb, tn)        f32
    y = jnp.dot(x_ref[...], w_ref[...], preferred_element_type=jnp.float32)
    o_ref[...] = jax.nn.sigmoid(y + b_ref[...])


def prepare_classifier_params(weight, bias):
    """One-time parameter relayout (do this at load time, NOT per forward call).

    weight: (n_classes, n_input) PyTorch nn.Linear layout
    bias  : (n_classes,)
    returns w_t (n_input, n_pad) f32, b2 (1, n_pad) f32 with n_pad = ceil128(n_classes).
    """
    n_classes, n_input = weight.shape
    n_pad = _round_up(n_classes, _LANE)
    w_t = jnp.zeros((n_input, n_pad), jnp.float32)
    w_t = w_t.at[:, :n_classes].set(jnp.asarray(weight, jnp.float32).T)
    b2 = jnp.zeros((1, n_pad), jnp.float32)
    b2 = b2.at[0, :n_classes].set(jnp.asarray(bias, jnp.float32))
    return w_t, b2


@functools.partial(jax.jit, static_argnames=("n_classes",))
def sample_classifier_forward(latent, w_t, b2, *, n_classes):
    """Equivalent of `sigmoid(latent @ W.T + b)` (float32 on TPU).

    latent: (B, n_input) float32
    w_t   : (n_input, n_pad) float32   (from prepare_classifier_params)
    b2    : (1, n_pad) float32
    returns (B, n_classes) float32
    """
    B, n_input = latent.shape
    n_pad = w_t.shape[1]

    # Batch tile: multiple of 8 sublanes; aim for >= 2 grid steps when B allows
    # (v7x has 2 TensorCores and shards "parallel" grid axes across them).
    tb = min(512, _round_up(pl.cdiv(B, 2), _SUBLANE))
    tb = max(_SUBLANE, tb)
    # Class tile: lane-dense (multiple of 128); cap so the resident weight tile
    # stays modest even on v7x's 64 MiB VMEM.
    tn = min(n_pad, 512)

    grid = (pl.cdiv(B, tb), n_pad // tn)

    # Explicit VMEM budget derived from the tiles (double-buffered operands).
    elem = 4  # f32
    vmem_needed = 2 * elem * (tb * n_input + n_input * tn + tn + tb * tn)
    vmem_limit = min(max(vmem_needed + (1 << 20), 8 << 20), 64 << 20)

    x = latent.astype(jnp.float32)

    out_padded = pl.pallas_call(
        _linear_sigmoid_kernel,
        out_shape=jax.ShapeDtypeStruct((B, n_pad), jnp.float32),
        grid=grid,
        in_specs=[
            pl.BlockSpec((tb, n_input), lambda i, j: (i, 0)),   # batch-tiled activations
            pl.BlockSpec((n_input, tn), lambda i, j: (0, j)),   # (K, N) weight tile
            pl.BlockSpec((1, tn), lambda i, j: (0, j)),         # bias tile
        ],
        out_specs=pl.BlockSpec((tb, tn), lambda i, j: (i, j)),
        compiler_params=pltpu.CompilerParams(
            dimension_semantics=("parallel", "parallel"),
            vmem_limit_bytes=vmem_limit,
        ),
    )(x, w_t, b2)

    return out_padded[:, :n_classes]


if __name__ == "__main__":
    # Small shapes implied by the module: latent vector -> class probabilities.
    B = 8          # batch
    n_input = 32   # latent dimension
    n_classes = 4  # number of classes

    key = jax.random.PRNGKey(0)
    k_x, k_w, k_b = jax.random.split(key, 3)

    # Deterministic parameter init mimicking nn.Linear default:
    # uniform(-1/sqrt(n_input), 1/sqrt(n_input)).
    bound = 1.0 / jnp.sqrt(jnp.float32(n_input))
    weight = jax.random.uniform(
        k_w, (n_classes, n_input), dtype=jnp.float32, minval=-bound, maxval=bound
    )
    bias = jax.random.uniform(
        k_b, (n_classes,), dtype=jnp.float32, minval=-bound, maxval=bound
    )
    latent = jax.random.normal(k_x, (B, n_input), dtype=jnp.float32)

    # One-time parameter relayout (outside the jitted per-step forward).
    w_t, b2 = prepare_classifier_params(weight, bias)

    out = sample_classifier_forward(latent, w_t, b2, n_classes=n_classes)
    out = jax.block_until_ready(out)

    # Reference: plain-JAX sigmoid(linear(latent)).
    ref = jax.nn.sigmoid(latent @ weight.T + bias)

    assert out.shape == (B, n_classes), out.shape
    assert out.dtype == jnp.float32, out.dtype
    assert jnp.allclose(out, ref, atol=1e-3, rtol=1e-3), (
        "mismatch vs reference: max abs err = "
        f"{float(jnp.max(jnp.abs(out - ref)))}"
    )

    print("KERNEL_OK")
</pallas_src>

<mosaic_0001>
module attributes {stable_mosaic.version = 11 : i64} {
  func.func @_linear_sigmoid_kernel(%arg0: i32, %arg1: i32, %arg2: memref<8x32xf32, #tpu.memory_space<vmem>>, %arg3: memref<32x128xf32, #tpu.memory_space<vmem>>, %arg4: memref<1x128xf32, #tpu.memory_space<vmem>>, %arg5: memref<8x128xf32, #tpu.memory_space<vmem>>) attributes {dimension_semantics = [#tpu.dimension_semantics<parallel>, #tpu.dimension_semantics<parallel>], iteration_bounds = array<i64: 1, 1>, scalar_prefetch = 0 : i64, scratch_operands = 0 : i64, tpu.core_type = #tpu.core_type<tc>, window_params = [{transform_indices = @transform_0, window_bounds = array<i64: 8, 32>}, {transform_indices = @transform_1, window_bounds = array<i64: 32, 128>}, {transform_indices = @transform_2, window_bounds = array<i64: 1, 128>}, {transform_indices = @transform_3, window_bounds = array<i64: 8, 128>}]} {
    %c0 = arith.constant 0 : index
    %c0_0 = arith.constant 0 : index
    %0 = vector.load %arg2[%c0, %c0_0] : memref<8x32xf32, #tpu.memory_space<vmem>>, vector<8x32xf32>
    %c0_1 = arith.constant 0 : index
    %c0_2 = arith.constant 0 : index
    %1 = vector.load %arg3[%c0_1, %c0_2] : memref<32x128xf32, #tpu.memory_space<vmem>>, vector<32x128xf32>
    %cst = arith.constant dense<0.000000e+00> : vector<8x128xf32>
    %2 = tpu.matmul %0, %1, %cst {dimension_numbers = #tpu.dot_dimension_numbers<[1], [0], [0], [1], [0, 0, 1, 1], [], []>} : vector<8x32xf32>, vector<32x128xf32>, vector<8x128xf32> -> vector<8x128xf32>
    %c0_3 = arith.constant 0 : index
    %c0_4 = arith.constant 0 : index
    %3 = vector.load %arg4[%c0_3, %c0_4] : memref<1x128xf32, #tpu.memory_space<vmem>>, vector<1x128xf32>
    %4 = vector.broadcast %3 : vector<1x128xf32> to vector<8x128xf32>
    %5 = arith.addf %2, %4 : vector<8x128xf32>
    %6 = arith.negf %5 : vector<8x128xf32>
    %7 = math.exp %6 : vector<8x128xf32>
    %cst_5 = arith.constant 1.000000e+00 : f32
    %8 = vector.broadcast %cst_5 : f32 to vector<8x128xf32>
    %9 = arith.addf %8, %7 : vector<8x128xf32>
    %10 = arith.divf %8, %9 : vector<8x128xf32>
    %c0_6 = arith.constant 0 : index
    %c0_7 = arith.constant 0 : index
    %11 = vector.load %arg5[%c0_6, %c0_7] : memref<8x128xf32, #tpu.memory_space<vmem>>, vector<8x128xf32>
    tpu.vector_store %arg5[%c0_6, %c0_7], %10 {strides = array<i32>} : memref<8x128xf32, #tpu.memory_space<vmem>>, vector<8x128xf32>,
    return
  }
  func.func @transform_0(%arg0: i32, %arg1: i32) -> (i32, i32) {
    %c0_i32 = arith.constant 0 : i32
    %c0_i32_0 = arith.constant 0 : i32
    return %arg0, %c0_i32 : i32, i32
  }
  func.func @transform_1(%arg0: i32, %arg1: i32) -> (i32, i32) {
    %c0_i32 = arith.constant 0 : i32
    %c0_i32_0 = arith.constant 0 : i32
    return %c0_i32, %arg1 : i32, i32
  }
  func.func @transform_2(%arg0: i32, %arg1: i32) -> (i32, i32) {
    %c0_i32 = arith.constant 0 : i32
    %c0_i32_0 = arith.constant 0 : i32
    return %c0_i32, %arg1 : i32, i32
  }
  func.func @transform_3(%arg0: i32, %arg1: i32) -> (i32, i32) {
    %c0_i32 = arith.constant 0 : i32
    return %arg0, %arg1 : i32, i32
  }
}

</mosaic_0001>

<llo_original>
// kernel: sample_classifier_forward.1
$region0: #{sample_classifier_forward.1}
  #allocation0 [shape = 'u32[]', space=smem, size = 0x4, offset = 0x4, fixed_abs, tag = 'smem constant byte address 0x4 - core index']
  #allocation1 [shape = 'u32[72,128]{1,0:T(1,128)}', space=vmem, size = 0x9000, scoped, tag = 'internal scratch']
  %s0 = inlined_call_operand.hbm [shape: f32[8,32], index: 0, kind: input, shape index: {}]
  %s1 = inlined_call_operand.hbm [shape: f32[32,128], index: 1, kind: input, shape index: {}]
  %s2 = inlined_call_operand.vmem [shape: f32[1,128], index: 2, kind: input, shape index: {}]
  %s3 = inlined_call_operand.vmem [shape: f32[8,128], index: 3, kind: output, shape index: {}]
  %s4 = sld [smem:[#allocation0]]
  $region30: #{sample_classifier_forward.1} parent=0
    _
  %s6 = ssub.s32 1, %s4
  %s7 = scalar_select 0, %s6, %s4
  $region1: #{sample_classifier_forward.1} parent=0
    #allocation2 [shape = 'u8[4096]{0}', space=vmem, size = 0x1000, scoped, tag = 'input window, operand 0, single buffered']
    #allocation3 [shape = 's32[1]{0}', space=sflag, size = 0x4, scoped, tag = 'scoped memory for sample_classifier_forward.1']
    #allocation4 [shape = 'u8[16384]{0}', space=vmem, size = 0x4000, scoped, tag = 'input window, operand 1, single buffered']
    #allocation5 [shape = 's32[1]{0}', space=sflag, size = 0x4, scoped, tag = 'scoped memory for sample_classifier_forward.1']
    %8 = vsyncpa [#allocation3], 0
    %9 = vsyncpa [#allocation5], 0
    // Predicated region
    $region2: #{sample_classifier_forward.1} parent=1 // pred_check
      _
    $region3: #{sample_classifier_forward.1} parent=1 // pred_check_branch
      %11 = sbr.rel (0) target = $region5
    $region4: #{sample_classifier_forward.1} parent=1 // pred_region
      %13 = vsyncadd [#allocation3], 0
      %s15 = sshll.u32 %s0, 4
      %s16 = int_to_ptr.hbm [resolvable:$true] %s15
      %s17 = sshll.u32 [#allocation2], 4
      %s18 = int_to_ptr.vmem [resolvable:$true] %s17
      %20 = dma.hbm_to_vmem [thread:$0]  %s16, 128, %s18, [#allocation3]
    $region5: #{sample_classifier_forward.1} parent=1 // pred_fallthru
      _
    // Predicated region
    $region6: #{sample_classifier_forward.1} parent=1 // pred_check
      _
    $region7: #{sample_classifier_forward.1} parent=1 // pred_check_branch
      %22 = sbr.rel (0) target = $region9
    $region8: #{sample_classifier_forward.1} parent=1 // pred_region
      %24 = vsyncadd [#allocation5], 0
      %s25 = sshll.u32 %s1, 4
      %s26 = int_to_ptr.hbm [resolvable:$true] %s25
      %s27 = sshll.u32 [#allocation4], 4
      %s28 = int_to_ptr.vmem [resolvable:$true] %s27
      %33 = dma.hbm_to_vmem [thread:$0]  %s26, 512, %s28, [#allocation5], 128, 128, 8
    $region9: #{sample_classifier_forward.1} parent=1 // pred_fallthru
      _
    // Predicated region
    $region10: #{sample_classifier_forward.1} parent=1 // pred_check
      _
    $region11: #{sample_classifier_forward.1} parent=1 // pred_check_branch
      %35 = sbr.rel (0) target = $region13
    $region12: #{sample_classifier_forward.1} parent=1 // pred_region
      _
    $region13: #{sample_classifier_forward.1} parent=1 // pred_fallthru
      _
    // Predicated region
    $region14: #{sample_classifier_forward.1} parent=1 // pred_check
      _
    $region15: #{sample_classifier_forward.1} parent=1 // pred_check_branch
      %37 = sbr.rel (0) target = $region17
    $region16: #{sample_classifier_forward.1} parent=1 // pred_region
      %39 = dma.done [#allocation3], 128
    $region17: #{sample_classifier_forward.1} parent=1 // pred_fallthru
      _
    // Predicated region
    $region18: #{sample_classifier_forward.1} parent=1 // pred_check
      _
    $region19: #{sample_classifier_forward.1} parent=1 // pred_check_branch
      %41 = sbr.rel (0) target = $region21
    $region20: #{sample_classifier_forward.1} parent=1 // pred_region
      %43 = dma.done [#allocation5], 512
    $region21: #{sample_classifier_forward.1} parent=1 // pred_fallthru
      _
    %v44 = vld [vmem:[#allocation2] sm:$0xff]
    %v45 = vld [vmem:[#allocation4] sm:$0xff]
    %v46 = vld [vmem:[#allocation4 + $0x8] sm:$0xff]
    %v47 = vld [vmem:[#allocation4 + $0x10] sm:$0xff]
    %v48 = vld [vmem:[#allocation4 + $0x18] sm:$0xff]
    %v49 = vld [vmem:[%s2] sm:$0x1]
    %v51 = vperm.slane %v49, 0
    %vm53 = vcmask 261120
    %v55 = vsel %vm53, %v44, 0
    %57 = vmatpush.msra.mxu0 0.0
    %58 = vmatpush.msra.mxu0 0.0
    %59 = vmatpush.msra.mxu0 0.0
    %60 = vmatpush.msra.mxu0 0.0
    %61 = vmatpush.msra.mxu0 0.0
    %62 = vmatpush.msra.mxu0 0.0
    %63 = vmatpush.msra.mxu0 0.0
    %64 = vmatpush.msra.mxu0 0.0
    %65 = vmatpush.msra.mxu0 0.0
    %66 = vmatpush.msra.mxu0 0.0
    %67 = vmatpush.msra.mxu0 0.0
    %68 = vmatpush.msra.mxu0 0.0
    %69 = vmatpush.msra.mxu0 %v48
    %70 = vmatpush.msra.mxu0 %v47
    %71 = vmatpush.msra.mxu0 %v46
    %72 = vmatpush.msra.mxu0 %v45
    %73 = vmatmul.f32.gmra.mxu0 %v55
    %v74 = vpop.f32.mrf.mxu0
    %v75 = vadd.f32 %v51, %v74
    %76 = vdwg.mxu0
    %v77 = vxor.u32 %v75, 2147483648
    %v78 = vmul.f32 %v77, 1.442695
    %v79 = vpow.pop %v78
    %v80 = vadd.f32 %v79, 1.0
    %v81 = vrcp.pop %v80
    %v82 = vmul.f32 %v80, %v81
    %v83 = vsub.f32 1.0, %v82
    %v84 = vmul.f32 %v81, %v83
    %v85 = vadd.f32 %v81, %v84
    %vm86 = vweird.f32 %v80
    %vm87 = vweird.f32 %v81
    %vm88 = vmor %vm86, %vm87
    %v89 = vsel %vm88, %v81, %v85
    %v90 = vand.u32 2147483647, %v80
    %vm91 = vcmp.eq.f32.partialorder %v90, 8.507059e+37
    %v92 = vand.u32 %v80, 2147483648
    %v93 = vor.u32 1.1754944e-38, %v92
    %v94 = vsel %vm91, %v93, %v89
    %v95 = vmul.f32 1.0, %v94
    %96 = vst [vmem:[%s3] sm:$0xff] %v95
    // Predicated region
    $region22: #{sample_classifier_forward.1} parent=1 // pred_check
      _
    $region23: #{sample_classifier_forward.1} parent=1 // pred_check_branch
      %98 = sbr.rel (0) target = $region25
    $region24: #{sample_classifier_forward.1} parent=1 // pred_region
      _
    $region25: #{sample_classifier_forward.1} parent=1 // pred_fallthru
      _
    // Predicated region
    $region26: #{sample_classifier_forward.1} parent=1 // pred_check
      _
    $region27: #{sample_classifier_forward.1} parent=1 // pred_check_branch
      %100 = sbr.rel (0) target = $region29
    $region28: #{sample_classifier_forward.1} parent=1 // pred_region
      _
    $region29: #{sample_classifier_forward.1} parent=1 // pred_fallthru
      _
    %101 = vsyncpa [#allocation3], 1
    %102 = vsyncpa [#allocation5], 1

</llo_original>
